<compile_context>
chip_gen: v7x
topology: tpu7x:2x2x1
jax: 0.10.0
libtpu: 0.0.40
codegen_flags: <defaults>
</compile_context>

<pallas_src>
import functools

import jax
import jax.numpy as jnp
from jax import lax
from jax.experimental import pallas as pl
from jax.experimental.pallas import tpu as pltpu


# -----------------------------------------------------------------------------
# Kernel. Refs (per grid step, nb samples folded into one step):
#   xe_ref    : (nb, Cin, HWe)  bf16  row-padded, flattened input (+1 lead/+pad)
#   w_ref     : (9, Cout, Cin)  bf16  conv taps, t = 3*ky + kx
#   mavg_ref  : (Cout, Cout)    f32   group-averaging matrix (rows sum to 1/n)
#   params_ref: (3, Cout, 1)    f32   [bias, gamma, beta]
#   cmask_ref : (2, HW)         bf16  [x>=1 mask, x<=W-2 mask] (0/1)
#   out_ref   : (nb, Cout, HW)  f32   NCHW-flat output, HW on lanes
# -----------------------------------------------------------------------------
def _block_kernel(xe_ref, w_ref, mavg_ref, params_ref, cmask_ref, out_ref, *, H, W):
    nb, Cout, HW = out_ref.shape
    eps = 1e-5  # PyTorch GroupNorm default

    bias = params_ref[0]          # (Cout, 1) f32
    gamma = params_ref[1]
    beta = params_ref[2]
    mavg = mavg_ref[...]          # (Cout, Cout) f32

    cm = cmask_ref[...]           # (2, HW) bf16
    mask_left = cm[0:1, :]        # valid when source col x-1 >= 0
    mask_right = cm[1:2, :]       # valid when source col x+1 <= W-1

    for s in range(nb):
        # ---- conv3x3: 9 accumulating MXU dots on lane-shifted taps ----------
        acc = jnp.zeros((Cout, HW), jnp.float32)
        for ky in range(3):
            for kx in range(3):
                off = ky * W + kx                       # static lane offset
                tap = xe_ref[s, :, pl.ds(off, HW)]      # (Cin, HW) bf16
                if kx == 0:
                    tap = tap * mask_left
                elif kx == 2:
                    tap = tap * mask_right
                acc = acc + jnp.dot(w_ref[3 * ky + kx], tap,
                                    preferred_element_type=jnp.float32)

        h = acc + bias                                   # (Cout, HW) f32

        # ---- GroupNorm (two-pass, centered variance) ------------------------
        # pass 1: per-channel lane sums, then one tiny matvec to get the
        # per-group mean already broadcast back onto channels.
        ch_sum = jnp.sum(h, axis=1, keepdims=True)                      # (Cout,1)
        mean = jnp.dot(mavg, ch_sum, preferred_element_type=jnp.float32)

        # pass 2: variance of centered values.
        d = h - mean
        ch_sq = jnp.sum(d * d, axis=1, keepdims=True)                   # (Cout,1)
        var = jnp.dot(mavg, ch_sq, preferred_element_type=jnp.float32)

        scale = gamma * lax.rsqrt(var + eps)                            # (Cout,1)
        hn = d * scale + beta                                           # (Cout,HW)

        # ---- SiLU, lane-dense store -----------------------------------------
        out_ref[s] = (hn * jax.nn.sigmoid(hn)).astype(out_ref.dtype)


def _pick_samples_per_step(B, HW):
    """Fold samples per grid step (>= ~2048 lanes/step) but keep >=2 steps."""
    target = max(1, 2048 // max(HW, 1))
    cap = max(1, B // 2) if B >= 2 else 1
    nb = 1
    for c in range(1, B + 1):
        if B % c == 0 and c <= min(target, cap):
            nb = c
    return nb


def _pick_vmem_limit():
    """~75% of physical VMEM: ~96 MiB on v5e/v6e, 48 MiB on v7x."""
    try:
        cap = pltpu.get_tpu_info().vmem_capacity_bytes
    except Exception:
        cap = 64 * 1024 * 1024
    return int(min(100 * 1024 * 1024, cap * 3 // 4))


# -----------------------------------------------------------------------------
# Wrapper: NCHW in / NCHW out (PyTorch Block semantics)
# -----------------------------------------------------------------------------
@functools.partial(jax.jit, static_argnames=("groups",))
def block_forward(x_nchw, w_hwio, bias, gamma, beta, *, groups):
    B, Cin, H, W = x_nchw.shape
    Cout = w_hwio.shape[-1]
    assert Cout % groups == 0
    cpg = Cout // groups
    HW = H * W

    # --- input slab: rows padded by 1 (top/bottom), flattened, +1 lead/+pad ---
    # xe[:, :, 1 + r*W + c] = x padded-by-rows at (row r, col c); taps become
    # constant lane offsets off = ky*W + kx.  Only ~(2W+2)/HW extra bytes.
    xpr = jnp.pad(x_nchw, ((0, 0), (0, 0), (1, 1), (0, 0)))     # (B,Cin,H+2,W)
    xflat = xpr.reshape(B, Cin, (H + 2) * W)
    hwe = (H + 2) * W + 2
    hwe_pad = ((hwe + 127) // 128) * 128                        # lane-aligned
    xe = jnp.pad(xflat, ((0, 0), (0, 0), (1, hwe_pad - (H + 2) * W - 1)))
    xe = xe.astype(jnp.bfloat16)                                # bf16 MXU operand

    # --- conv weights (3,3,Cin,Cout) -> (9, Cout, Cin), bf16 ------------------
    w9 = jnp.transpose(w_hwio, (0, 1, 3, 2)).reshape(9, Cout, Cin)
    w9 = w9.astype(jnp.bfloat16)

    # --- group-averaging matrix: mavg[i,j] = 1/(cpg*HW) if same group ---------
    cid = jnp.arange(Cout)
    same = (cid[:, None] // cpg) == (cid[None, :] // cpg)
    mavg = same.astype(jnp.float32) / float(cpg * HW)

    # --- merged affine params + column-validity masks -------------------------
    params = jnp.stack([bias, gamma, beta]).reshape(3, Cout, 1).astype(jnp.float32)
    col = jnp.arange(HW) % W
    cmask = jnp.stack([(col >= 1), (col <= W - 2)]).astype(jnp.bfloat16)  # (2,HW)

    nb = _pick_samples_per_step(B, HW)
    kernel = functools.partial(_block_kernel, H=H, W=W)

    out = pl.pallas_call(
        kernel,
        out_shape=jax.ShapeDtypeStruct((B, Cout, HW), jnp.float32),
        grid=(B // nb,),
        in_specs=[
            pl.BlockSpec((nb, Cin, hwe_pad), lambda i: (i, 0, 0)),  # input slab
            pl.BlockSpec((9, Cout, Cin), lambda i: (0, 0, 0)),      # weights
            pl.BlockSpec((Cout, Cout), lambda i: (0, 0)),           # group avg
            pl.BlockSpec((3, Cout, 1), lambda i: (0, 0, 0)),        # bias/g/b
            pl.BlockSpec((2, HW), lambda i: (0, 0)),                # col masks
        ],
        out_specs=pl.BlockSpec((nb, Cout, HW), lambda i: (i, 0, 0)),
        compiler_params=pltpu.CompilerParams(
            dimension_semantics=("parallel",),
            vmem_limit_bytes=_pick_vmem_limit(),
        ),
    )(xe, w9, mavg, params, cmask)

    return out.reshape(B, Cout, H, W)


# -----------------------------------------------------------------------------
# Pure-JAX reference (matches PyTorch Block.forward, f32 throughout)
# -----------------------------------------------------------------------------
def reference_forward(x_nchw, w_hwio, bias, gamma, beta, groups):
    xn = jnp.transpose(x_nchw, (0, 2, 3, 1))                      # NHWC
    y = lax.conv_general_dilated(
        xn, w_hwio, (1, 1), "SAME",
        dimension_numbers=("NHWC", "HWIO", "NHWC")) + bias
    y = jnp.transpose(y, (0, 3, 1, 2))                            # NCHW
    B, C, H, W = y.shape
    yg = y.reshape(B, groups, C // groups, H, W)
    mean = yg.mean(axis=(2, 3, 4), keepdims=True)
    var = yg.var(axis=(2, 3, 4), keepdims=True)
    yn = ((yg - mean) * lax.rsqrt(var + 1e-5)).reshape(B, C, H, W)
    yn = yn * gamma[None, :, None, None] + beta[None, :, None, None]
    return yn * jax.nn.sigmoid(yn)


# -----------------------------------------------------------------------------
# Main
# -----------------------------------------------------------------------------
if __name__ == "__main__":
    B, Cin, H, W = 2, 4, 16, 16
    Cout, groups = 8, 4

    key = jax.random.PRNGKey(0)
    k0, k1, k2, k3, k4 = jax.random.split(key, 5)

    w_hwio = 0.1 * jax.random.normal(k0, (3, 3, Cin, Cout), jnp.float32)
    bias = 0.1 * jax.random.normal(k1, (Cout,), jnp.float32)
    gamma = 1.0 + 0.1 * jax.random.normal(k2, (Cout,), jnp.float32)
    beta = 0.1 * jax.random.normal(k3, (Cout,), jnp.float32)
    x = jax.random.normal(k4, (B, Cin, H, W), jnp.float32)

    out = block_forward(x, w_hwio, bias, gamma, beta, groups=groups)
    out = jax.block_until_ready(out)

    ref = jax.block_until_ready(
        reference_forward(x, w_hwio, bias, gamma, beta, groups))

    assert out.shape == (B, Cout, H, W), out.shape
    max_err = float(jnp.max(jnp.abs(out - ref)))
    # bf16 MXU operands vs f32 reference conv: allow a bf16-sized tolerance.
    assert jnp.allclose(out, ref, atol=2e-2, rtol=2e-2), max_err

    print("KERNEL_OK")
</pallas_src>

<mosaic_0001>
module attributes {stable_mosaic.version = 11 : i64} {
  func.func @_block_kernel(%arg0: i32, %arg1: memref<1x4x384xbf16, #tpu.memory_space<vmem>>, %arg2: memref<9x8x4xbf16, #tpu.memory_space<vmem>>, %arg3: memref<8x8xf32, #tpu.memory_space<vmem>>, %arg4: memref<3x8x1xf32, #tpu.memory_space<vmem>>, %arg5: memref<2x256xbf16, #tpu.memory_space<vmem>>, %arg6: memref<1x8x256xf32, #tpu.memory_space<vmem>>) attributes {dimension_semantics = [#tpu.dimension_semantics<parallel>], iteration_bounds = array<i64: 2>, scalar_prefetch = 0 : i64, scratch_operands = 0 : i64, tpu.core_type = #tpu.core_type<tc>, window_params = [{transform_indices = @transform_0, window_bounds = array<i64: 1, 4, 384>}, {pipeline_mode = #tpu.pipeline_mode<synchronous>, transform_indices = @transform_1, window_bounds = array<i64: 9, 8, 4>}, {pipeline_mode = #tpu.pipeline_mode<synchronous>, transform_indices = @transform_2, window_bounds = array<i64: 8, 8>}, {pipeline_mode = #tpu.pipeline_mode<synchronous>, transform_indices = @transform_3, window_bounds = array<i64: 3, 8, 1>}, {pipeline_mode = #tpu.pipeline_mode<synchronous>, transform_indices = @transform_4, window_bounds = array<i64: 2, 256>}, {transform_indices = @transform_5, window_bounds = array<i64: 1, 8, 256>}]} {
    %c0 = arith.constant 0 : index
    %c0_0 = arith.constant 0 : index
    %c0_1 = arith.constant 0 : index
    %0 = vector.load %arg4[%c0, %c0_0, %c0_1] : memref<3x8x1xf32, #tpu.memory_space<vmem>>, vector<1x8x1xf32>
    %1 = vector.shape_cast %0 : vector<1x8x1xf32> to vector<8x1xf32>
    %c1 = arith.constant 1 : index
    %c0_2 = arith.constant 0 : index
    %c0_3 = arith.constant 0 : index
    %2 = vector.load %arg4[%c1, %c0_2, %c0_3] : memref<3x8x1xf32, #tpu.memory_space<vmem>>, vector<1x8x1xf32>
    %3 = vector.shape_cast %2 : vector<1x8x1xf32> to vector<8x1xf32>
    %c2 = arith.constant 2 : index
    %c0_4 = arith.constant 0 : index
    %c0_5 = arith.constant 0 : index
    %4 = vector.load %arg4[%c2, %c0_4, %c0_5] : memref<3x8x1xf32, #tpu.memory_space<vmem>>, vector<1x8x1xf32>
    %5 = vector.shape_cast %4 : vector<1x8x1xf32> to vector<8x1xf32>
    %c0_6 = arith.constant 0 : index
    %c0_7 = arith.constant 0 : index
    %6 = vector.load %arg3[%c0_6, %c0_7] : memref<8x8xf32, #tpu.memory_space<vmem>>, vector<8x8xf32>
    %c0_8 = arith.constant 0 : index
    %c0_9 = arith.constant 0 : index
    %7 = vector.load %arg5[%c0_8, %c0_9] : memref<2x256xbf16, #tpu.memory_space<vmem>>, vector<2x256xbf16>
    %8 = vector.extract_strided_slice %7 {offsets = [0, 0], sizes = [1, 256], strides = [1, 1]} : vector<2x256xbf16> to vector<1x256xbf16>
    %9 = vector.extract_strided_slice %7 {offsets = [1, 0], sizes = [1, 256], strides = [1, 1]} : vector<2x256xbf16> to vector<1x256xbf16>
    %cst = arith.constant 0.000000e+00 : f32
    %10 = vector.broadcast %cst : f32 to vector<8x256xf32>
    %c0_10 = arith.constant 0 : index
    %c0_11 = arith.constant 0 : index
    %c0_12 = arith.constant 0 : index
    %11 = vector.load %arg1[%c0_10, %c0_11, %c0_12] : memref<1x4x384xbf16, #tpu.memory_space<vmem>>, vector<1x4x256xbf16>
    %12 = vector.shape_cast %11 : vector<1x4x256xbf16> to vector<4x256xbf16>
    %13 = vector.broadcast %8 : vector<1x256xbf16> to vector<4x256xbf16>
    %14 = arith.mulf %12, %13 : vector<4x256xbf16>
    %c0_13 = arith.constant 0 : index
    %c0_14 = arith.constant 0 : index
    %c0_15 = arith.constant 0 : index
    %15 = vector.load %arg2[%c0_13, %c0_14, %c0_15] : memref<9x8x4xbf16, #tpu.memory_space<vmem>>, vector<1x8x4xbf16>
    %16 = vector.shape_cast %15 : vector<1x8x4xbf16> to vector<8x4xbf16>
    %cst_16 = arith.constant dense<0.000000e+00> : vector<8x256xf32>
    %17 = tpu.matmul %16, %14, %cst_16 {dimension_numbers = #tpu.dot_dimension_numbers<[1], [0], [0], [1], [0, 0, 1, 1], [], []>} : vector<8x4xbf16>, vector<4x256xbf16>, vector<8x256xf32> -> vector<8x256xf32>
    %18 = arith.addf %10, %17 : vector<8x256xf32>
    %c0_17 = arith.constant 0 : index
    %c0_18 = arith.constant 0 : index
    %c1_19 = arith.constant 1 : index
    %19 = vector.load %arg1[%c0_17, %c0_18, %c1_19] : memref<1x4x384xbf16, #tpu.memory_space<vmem>>, vector<1x4x256xbf16>
    %20 = vector.shape_cast %19 : vector<1x4x256xbf16> to vector<4x256xbf16>
    %c1_20 = arith.constant 1 : index
    %c0_21 = arith.constant 0 : index
    %c0_22 = arith.constant 0 : index
    %21 = vector.load %arg2[%c1_20, %c0_21, %c0_22] : memref<9x8x4xbf16, #tpu.memory_space<vmem>>, vector<1x8x4xbf16>
    %22 = vector.shape_cast %21 : vector<1x8x4xbf16> to vector<8x4xbf16>
    %cst_23 = arith.constant dense<0.000000e+00> : vector<8x256xf32>
    %23 = tpu.matmul %22, %20, %cst_23 {dimension_numbers = #tpu.dot_dimension_numbers<[1], [0], [0], [1], [0, 0, 1, 1], [], []>} : vector<8x4xbf16>, vector<4x256xbf16>, vector<8x256xf32> -> vector<8x256xf32>
    %24 = arith.addf %18, %23 : vector<8x256xf32>
    %c0_24 = arith.constant 0 : index
    %c0_25 = arith.constant 0 : index
    %c2_26 = arith.constant 2 : index
    %25 = vector.load %arg1[%c0_24, %c0_25, %c2_26] : memref<1x4x384xbf16, #tpu.memory_space<vmem>>, vector<1x4x256xbf16>
    %26 = vector.shape_cast %25 : vector<1x4x256xbf16> to vector<4x256xbf16>
    %27 = vector.broadcast %9 : vector<1x256xbf16> to vector<4x256xbf16>
    %28 = arith.mulf %26, %27 : vector<4x256xbf16>
    %c2_27 = arith.constant 2 : index
    %c0_28 = arith.constant 0 : index
    %c0_29 = arith.constant 0 : index
    %29 = vector.load %arg2[%c2_27, %c0_28, %c0_29] : memref<9x8x4xbf16, #tpu.memory_space<vmem>>, vector<1x8x4xbf16>
    %30 = vector.shape_cast %29 : vector<1x8x4xbf16> to vector<8x4xbf16>
    %cst_30 = arith.constant dense<0.000000e+00> : vector<8x256xf32>
    %31 = tpu.matmul %30, %28, %cst_30 {dimension_numbers = #tpu.dot_dimension_numbers<[1], [0], [0], [1], [0, 0, 1, 1], [], []>} : vector<8x4xbf16>, vector<4x256xbf16>, vector<8x256xf32> -> vector<8x256xf32>
    %32 = arith.addf %24, %31 : vector<8x256xf32>
    %c0_31 = arith.constant 0 : index
    %c0_32 = arith.constant 0 : index
    %c16 = arith.constant 16 : index
    %33 = vector.load %arg1[%c0_31, %c0_32, %c16] : memref<1x4x384xbf16, #tpu.memory_space<vmem>>, vector<1x4x256xbf16>
    %34 = vector.shape_cast %33 : vector<1x4x256xbf16> to vector<4x256xbf16>
    %35 = vector.broadcast %8 : vector<1x256xbf16> to vector<4x256xbf16>
    %36 = arith.mulf %34, %35 : vector<4x256xbf16>
    %c3 = arith.constant 3 : index
    %c0_33 = arith.constant 0 : index
    %c0_34 = arith.constant 0 : index
    %37 = vector.load %arg2[%c3, %c0_33, %c0_34] : memref<9x8x4xbf16, #tpu.memory_space<vmem>>, vector<1x8x4xbf16>
    %38 = vector.shape_cast %37 : vector<1x8x4xbf16> to vector<8x4xbf16>
    %cst_35 = arith.constant dense<0.000000e+00> : vector<8x256xf32>
    %39 = tpu.matmul %38, %36, %cst_35 {dimension_numbers = #tpu.dot_dimension_numbers<[1], [0], [0], [1], [0, 0, 1, 1], [], []>} : vector<8x4xbf16>, vector<4x256xbf16>, vector<8x256xf32> -> vector<8x256xf32>
    %40 = arith.addf %32, %39 : vector<8x256xf32>
    %c0_36 = arith.constant 0 : index
    %c0_37 = arith.constant 0 : index
    %c17 = arith.constant 17 : index
    %41 = vector.load %arg1[%c0_36, %c0_37, %c17] : memref<1x4x384xbf16, #tpu.memory_space<vmem>>, vector<1x4x256xbf16>
    %42 = vector.shape_cast %41 : vector<1x4x256xbf16> to vector<4x256xbf16>
    %c4 = arith.constant 4 : index
    %c0_38 = arith.constant 0 : index
    %c0_39 = arith.constant 0 : index
    %43 = vector.load %arg2[%c4, %c0_38, %c0_39] : memref<9x8x4xbf16, #tpu.memory_space<vmem>>, vector<1x8x4xbf16>
    %44 = vector.shape_cast %43 : vector<1x8x4xbf16> to vector<8x4xbf16>
    %cst_40 = arith.constant dense<0.000000e+00> : vector<8x256xf32>
    %45 = tpu.matmul %44, %42, %cst_40 {dimension_numbers = #tpu.dot_dimension_numbers<[1], [0], [0], [1], [0, 0, 1, 1], [], []>} : vector<8x4xbf16>, vector<4x256xbf16>, vector<8x256xf32> -> vector<8x256xf32>
    %46 = arith.addf %40, %45 : vector<8x256xf32>
    %c0_41 = arith.constant 0 : index
    %c0_42 = arith.constant 0 : index
    %c18 = arith.constant 18 : index
    %47 = vector.load %arg1[%c0_41, %c0_42, %c18] : memref<1x4x384xbf16, #tpu.memory_space<vmem>>, vector<1x4x256xbf16>
    %48 = vector.shape_cast %47 : vector<1x4x256xbf16> to vector<4x256xbf16>
    %49 = vector.broadcast %9 : vector<1x256xbf16> to vector<4x256xbf16>
    %50 = arith.mulf %48, %49 : vector<4x256xbf16>
    %c5 = arith.constant 5 : index
    %c0_43 = arith.constant 0 : index
    %c0_44 = arith.constant 0 : index
    %51 = vector.load %arg2[%c5, %c0_43, %c0_44] : memref<9x8x4xbf16, #tpu.memory_space<vmem>>, vector<1x8x4xbf16>
    %52 = vector.shape_cast %51 : vector<1x8x4xbf16> to vector<8x4xbf16>
    %cst_45 = arith.constant dense<0.000000e+00> : vector<8x256xf32>
    %53 = tpu.matmul %52, %50, %cst_45 {dimension_numbers = #tpu.dot_dimension_numbers<[1], [0], [0], [1], [0, 0, 1, 1], [], []>} : vector<8x4xbf16>, vector<4x256xbf16>, vector<8x256xf32> -> vector<8x256xf32>
    %54 = arith.addf %46, %53 : vector<8x256xf32>
    %c0_46 = arith.constant 0 : index
    %c0_47 = arith.constant 0 : index
    %c32 = arith.constant 32 : index
    %55 = vector.load %arg1[%c0_46, %c0_47, %c32] : memref<1x4x384xbf16, #tpu.memory_space<vmem>>, vector<1x4x256xbf16>
    %56 = vector.shape_cast %55 : vector<1x4x256xbf16> to vector<4x256xbf16>
    %57 = vector.broadcast %8 : vector<1x256xbf16> to vector<4x256xbf16>
    %58 = arith.mulf %56, %57 : vector<4x256xbf16>
    %c6 = arith.constant 6 : index
    %c0_48 = arith.constant 0 : index
    %c0_49 = arith.constant 0 : index
    %59 = vector.load %arg2[%c6, %c0_48, %c0_49] : memref<9x8x4xbf16, #tpu.memory_space<vmem>>, vector<1x8x4xbf16>
    %60 = vector.shape_cast %59 : vector<1x8x4xbf16> to vector<8x4xbf16>
    %cst_50 = arith.constant dense<0.000000e+00> : vector<8x256xf32>
    %61 = tpu.matmul %60, %58, %cst_50 {dimension_numbers = #tpu.dot_dimension_numbers<[1], [0], [0], [1], [0, 0, 1, 1], [], []>} : vector<8x4xbf16>, vector<4x256xbf16>, vector<8x256xf32> -> vector<8x256xf32>
    %62 = arith.addf %54, %61 : vector<8x256xf32>
    %c0_51 = arith.constant 0 : index
    %c0_52 = arith.constant 0 : index
    %c33 = arith.constant 33 : index
    %63 = vector.load %arg1[%c0_51, %c0_52, %c33] : memref<1x4x384xbf16, #tpu.memory_space<vmem>>, vector<1x4x256xbf16>
    %64 = vector.shape_cast %63 : vector<1x4x256xbf16> to vector<4x256xbf16>
    %c7 = arith.constant 7 : index
    %c0_53 = arith.constant 0 : index
    %c0_54 = arith.constant 0 : index
    %65 = vector.load %arg2[%c7, %c0_53, %c0_54] : memref<9x8x4xbf16, #tpu.memory_space<vmem>>, vector<1x8x4xbf16>
    %66 = vector.shape_cast %65 : vector<1x8x4xbf16> to vector<8x4xbf16>
    %cst_55 = arith.constant dense<0.000000e+00> : vector<8x256xf32>
    %67 = tpu.matmul %66, %64, %cst_55 {dimension_numbers = #tpu.dot_dimension_numbers<[1], [0], [0], [1], [0, 0, 1, 1], [], []>} : vector<8x4xbf16>, vector<4x256xbf16>, vector<8x256xf32> -> vector<8x256xf32>
    %68 = arith.addf %62, %67 : vector<8x256xf32>
    %c0_56 = arith.constant 0 : index
    %c0_57 = arith.constant 0 : index
    %c34 = arith.constant 34 : index
    %69 = vector.load %arg1[%c0_56, %c0_57, %c34] : memref<1x4x384xbf16, #tpu.memory_space<vmem>>, vector<1x4x256xbf16>
    %70 = vector.shape_cast %69 : vector<1x4x256xbf16> to vector<4x256xbf16>
    %71 = vector.broadcast %9 : vector<1x256xbf16> to vector<4x256xbf16>
    %72 = arith.mulf %70, %71 : vector<4x256xbf16>
    %c8 = arith.constant 8 : index
    %c0_58 = arith.constant 0 : index
    %c0_59 = arith.constant 0 : index
    %73 = vector.load %arg2[%c8, %c0_58, %c0_59] : memref<9x8x4xbf16, #tpu.memory_space<vmem>>, vector<1x8x4xbf16>
    %74 = vector.shape_cast %73 : vector<1x8x4xbf16> to vector<8x4xbf16>
    %cst_60 = arith.constant dense<0.000000e+00> : vector<8x256xf32>
    %75 = tpu.matmul %74, %72, %cst_60 {dimension_numbers = #tpu.dot_dimension_numbers<[1], [0], [0], [1], [0, 0, 1, 1], [], []>} : vector<8x4xbf16>, vector<4x256xbf16>, vector<8x256xf32> -> vector<8x256xf32>
    %76 = arith.addf %68, %75 : vector<8x256xf32>
    %77 = vector.broadcast %1 : vector<8x1xf32> to vector<8x256xf32>
    %78 = arith.addf %76, %77 : vector<8x256xf32>
    %cst_61 = arith.constant dense<0.000000e+00> : vector<8xf32>
    %79 = vector.multi_reduction <add>, %78, %cst_61 [1] : vector<8x256xf32> to vector<8xf32>
    %80 = vector.shape_cast %79 : vector<8xf32> to vector<8x1xf32>
    %cst_62 = arith.constant dense<0.000000e+00> : vector<8x1xf32>
    %81 = tpu.matmul %6, %80, %cst_62 {dimension_numbers = #tpu.dot_dimension_numbers<[1], [0], [0], [1], [0, 0, 1, 1], [], []>} : vector<8x8xf32>, vector<8x1xf32>, vector<8x1xf32> -> vector<8x1xf32>
    %82 = vector.broadcast %81 : vector<8x1xf32> to vector<8x256xf32>
    %83 = arith.subf %78, %82 : vector<8x256xf32>
    %84 = arith.mulf %83, %83 : vector<8x256xf32>
    %cst_63 = arith.constant dense<0.000000e+00> : vector<8xf32>
    %85 = vector.multi_reduction <add>, %84, %cst_63 [1] : vector<8x256xf32> to vector<8xf32>
    %86 = vector.shape_cast %85 : vector<8xf32> to vector<8x1xf32>
    %cst_64 = arith.constant dense<0.000000e+00> : vector<8x1xf32>
    %87 = tpu.matmul %6, %86, %cst_64 {dimension_numbers = #tpu.dot_dimension_numbers<[1], [0], [0], [1], [0, 0, 1, 1], [], []>} : vector<8x8xf32>, vector<8x1xf32>, vector<8x1xf32> -> vector<8x1xf32>
    %cst_65 = arith.constant 9.99999974E-6 : f32
    %88 = vector.broadcast %cst_65 : f32 to vector<8x1xf32>
    %89 = arith.addf %87, %88 : vector<8x1xf32>
    %90 = math.rsqrt %89 : vector<8x1xf32>
    %91 = arith.mulf %3, %90 : vector<8x1xf32>
    %92 = vector.broadcast %91 : vector<8x1xf32> to vector<8x256xf32>
    %93 = arith.mulf %83, %92 : vector<8x256xf32>
    %94 = vector.broadcast %5 : vector<8x1xf32> to vector<8x256xf32>
    %95 = arith.addf %93, %94 : vector<8x256xf32>
    %96 = arith.negf %95 : vector<8x256xf32>
    %97 = math.exp %96 : vector<8x256xf32>
    %cst_66 = arith.constant 1.000000e+00 : f32
    %98 = vector.broadcast %cst_66 : f32 to vector<8x256xf32>
    %99 = arith.addf %98, %97 : vector<8x256xf32>
    %100 = arith.divf %98, %99 : vector<8x256xf32>
    %101 = arith.mulf %95, %100 : vector<8x256xf32>
    %c0_67 = arith.constant 0 : index
    %c0_68 = arith.constant 0 : index
    %c0_69 = arith.constant 0 : index
    %102 = vector.load %arg6[%c0_67, %c0_68, %c0_69] : memref<1x8x256xf32, #tpu.memory_space<vmem>>, vector<1x8x256xf32>
    %103 = vector.shape_cast %102 : vector<1x8x256xf32> to vector<8x256xf32>
    %104 = vector.shape_cast %101 : vector<8x256xf32> to vector<1x8x256xf32>
    tpu.vector_store %arg6[%c0_67, %c0_68, %c0_69], %104 {strides = array<i32>} : memref<1x8x256xf32, #tpu.memory_space<vmem>>, vector<1x8x256xf32>,
    return
  }
  func.func @transform_0(%arg0: i32) -> (i32, i32, i32) {
    %c0_i32 = arith.constant 0 : i32
    %c0_i32_0 = arith.constant 0 : i32
    %c0_i32_1 = arith.constant 0 : i32
    return %arg0, %c0_i32, %c0_i32_0 : i32, i32, i32
  }
  func.func @transform_1(%arg0: i32) -> (i32, i32, i32) {
    %c0_i32 = arith.constant 0 : i32
    %c0_i32_0 = arith.constant 0 : i32
    %c0_i32_1 = arith.constant 0 : i32
    %c0_i32_2 = arith.constant 0 : i32
    return %c0_i32, %c0_i32_0, %c0_i32_1 : i32, i32, i32
  }
  func.func @transform_2(%arg0: i32) -> (i32, i32) {
    %c0_i32 = arith.constant 0 : i32
    %c0_i32_0 = arith.constant 0 : i32
    %c0_i32_1 = arith.constant 0 : i32
    return %c0_i32, %c0_i32_0 : i32, i32
  }
  func.func @transform_3(%arg0: i32) -> (i32, i32, i32) {
    %c0_i32 = arith.constant 0 : i32
    %c0_i32_0 = arith.constant 0 : i32
    %c0_i32_1 = arith.constant 0 : i32
    %c0_i32_2 = arith.constant 0 : i32
    return %c0_i32, %c0_i32_0, %c0_i32_1 : i32, i32, i32
  }
  func.func @transform_4(%arg0: i32) -> (i32, i32) {
    %c0_i32 = arith.constant 0 : i32
    %c0_i32_0 = arith.constant 0 : i32
    %c0_i32_1 = arith.constant 0 : i32
    return %c0_i32, %c0_i32_0 : i32, i32
  }
  func.func @transform_5(%arg0: i32) -> (i32, i32, i32) {
    %c0_i32 = arith.constant 0 : i32
    %c0_i32_0 = arith.constant 0 : i32
    %c0_i32_1 = arith.constant 0 : i32
    return %arg0, %c0_i32, %c0_i32_0 : i32, i32, i32
  }
}

</mosaic_0001>

<llo_original>
// kernel: block_forward.1
$region0: #{block_forward.1}
  #allocation0 [shape = 'u32[]', space=smem, size = 0x4, offset = 0x4, fixed_abs, tag = 'smem constant byte address 0x4 - core index']
  #allocation1 [shape = 'u32[144,128]{1,0:T(1,128)}', space=vmem, size = 0x12000, scoped, tag = 'internal scratch']
  %s0 = inlined_call_operand.vmem [shape: bf16[2,4,384], index: 0, kind: input, shape index: {}]
  %s1 = inlined_call_operand.vmem [shape: bf16[9,8,4], index: 1, kind: input, shape index: {}]
  %s2 = inlined_call_operand.vmem [shape: f32[8,8], index: 2, kind: input, shape index: {}]
  %s3 = inlined_call_operand.vmem [shape: f32[3,8,1], index: 3, kind: input, shape index: {}]
  %s4 = inlined_call_operand.vmem [shape: bf16[2,256], index: 4, kind: input, shape index: {}]
  %s5 = inlined_call_operand.vmem [shape: f32[2,8,256], index: 5, kind: output, shape index: {}]
  %s6 = sld [smem:[#allocation0]]
  $region53: #{block_forward.1} parent=0
    _
  %s8 = ssub.s32 1, %s6
  %s9 = scalar_select 0, %s8, %s6
  loop: start=0, step=1, limit=4
  $region2: #{block_forward.1} parent=0 // loop_pre_header
    _
  $region3: #{block_forward.1} parent=0 // loop_header
    %s11 = sphi 0, %s15
    %p12 = scmp.ge.s32.totalorder %s11, 4
    %s21 = sphi 0, %s23
    %s24 = sphi 0, %s21
    %s25 = sphi 0, %s24
    %s41 = sphi 0, %s25
    %s45 = sphi 0, %s45
    %s47 = sphi 0, %s45
    %s48 = sphi 0, %s47
    %s62 = sphi 0, %s48
    %s66 = sphi 0, %s66
    %s68 = sphi 0, %s66
    %s69 = sphi 0, %s68
    %s83 = sphi 0, %s69
    %s87 = sphi 0, %s87
    %s89 = sphi 0, %s87
    %s90 = sphi 0, %s89
    %s104 = sphi 0, %s90
    %s108 = sphi 0, %s108
    %s110 = sphi 0, %s108
    %s111 = sphi 0, %s110
    %s125 = sphi 0, %s111
    %s131 = sphi 0, %s133
    %s134 = sphi 0, %s131
    %s135 = sphi 0, %s134
    %s151 = sphi 0, %s135
  $region4: #{block_forward.1} parent=0 // loop_header_branch
    %14 = sbr.rel (%p12) target = $region8
  $region5: #{block_forward.1} parent=0 // loop_body
    %s16 = ssub.s32 %s11, 1
    %s17 = ssub.s32 %s11, 2
    %s18 = sadd.s32 %s11, 1
    %s19 = ssub.s32 %s11, %s18
    %p20 = scmp.eq.s32.totalorder %s19, 0
    %s22 = sadd.s32 %s21, 1
    %s23 = scalar_select %p20, %s21, %s22
    %p26 = pneg %p20
    %p27 = scmp.eq.s32.totalorder %s11, 1
    %p28 = por %p26, %p27
    %p29 = scmp.ne.s32.totalorder %s21, %s24
    %p30 = scmp.eq.s32.totalorder %s11, 0
    %p31 = por %p29, %p30
    %p32 = scmp.ne.s32.totalorder %s21, %s24
    %p33 = scmp.eq.s32.totalorder %s16, 1
    %p34 = por %p32, %p33
    %p35 = scmp.ne.s32.totalorder %s24, %s25
    %p36 = scmp.eq.s32.totalorder %s16, 0
    %p37 = por %p35, %p36
    %p38 = scmp.ne.s32.totalorder %s24, %s25
    %p39 = scmp.eq.s32.totalorder %s17, 1
    %p40 = por %p38, %p39
    %p42 = scmp.ne.s32.totalorder %s25, %s41
    %p43 = scmp.eq.s32.totalorder %s17, 0
    %p44 = por %p42, %p43
    %s46 = sadd.s32 %s45, 1
    %p49 = scmp.eq.s32.totalorder %s11, 1
    %p50 = scmp.ne.s32.totalorder %s45, %s47
    %p51 = scmp.eq.s32.totalorder %s11, 0
    %p52 = por %p50, %p51
    %p53 = scmp.ne.s32.totalorder %s45, %s47
    %p54 = scmp.eq.s32.totalorder %s16, 1
    %p55 = por %p53, %p54
    %p56 = scmp.ne.s32.totalorder %s47, %s48
    %p57 = scmp.eq.s32.totalorder %s16, 0
    %p58 = por %p56, %p57
    %p59 = scmp.ne.s32.totalorder %s47, %s48
    %p60 = scmp.eq.s32.totalorder %s17, 1
    %p61 = por %p59, %p60
    %p63 = scmp.ne.s32.totalorder %s48, %s62
    %p64 = scmp.eq.s32.totalorder %s17, 0
    %p65 = por %p63, %p64
    %s67 = sadd.s32 %s66, 1
    %p70 = scmp.eq.s32.totalorder %s11, 1
    %p71 = scmp.ne.s32.totalorder %s66, %s68
    %p72 = scmp.eq.s32.totalorder %s11, 0
    %p73 = por %p71, %p72
    %p74 = scmp.ne.s32.totalorder %s66, %s68
    %p75 = scmp.eq.s32.totalorder %s16, 1
    %p76 = por %p74, %p75
    %p77 = scmp.ne.s32.totalorder %s68, %s69
    %p78 = scmp.eq.s32.totalorder %s16, 0
    %p79 = por %p77, %p78
    %p80 = scmp.ne.s32.totalorder %s68, %s69
    %p81 = scmp.eq.s32.totalorder %s17, 1
    %p82 = por %p80, %p81
    %p84 = scmp.ne.s32.totalorder %s69, %s83
    %p85 = scmp.eq.s32.totalorder %s17, 0
    %p86 = por %p84, %p85
    %s88 = sadd.s32 %s87, 1
    %p91 = scmp.eq.s32.totalorder %s11, 1
    %p92 = scmp.ne.s32.totalorder %s87, %s89
    %p93 = scmp.eq.s32.totalorder %s11, 0
    %p94 = por %p92, %p93
    %p95 = scmp.ne.s32.totalorder %s87, %s89
    %p96 = scmp.eq.s32.totalorder %s16, 1
    %p97 = por %p95, %p96
    %p98 = scmp.ne.s32.totalorder %s89, %s90
    %p99 = scmp.eq.s32.totalorder %s16, 0
    %p100 = por %p98, %p99
    %p101 = scmp.ne.s32.totalorder %s89, %s90
    %p102 = scmp.eq.s32.totalorder %s17, 1
    %p103 = por %p101, %p102
    %p105 = scmp.ne.s32.totalorder %s90, %s104
    %p106 = scmp.eq.s32.totalorder %s17, 0
    %p107 = por %p105, %p106
    %s109 = sadd.s32 %s108, 1
    %p112 = scmp.eq.s32.totalorder %s11, 1
    %p113 = scmp.ne.s32.totalorder %s108, %s110
    %p114 = scmp.eq.s32.totalorder %s11, 0
    %p115 = por %p113, %p114
    %p116 = scmp.ne.s32.totalorder %s108, %s110
    %p117 = scmp.eq.s32.totalorder %s16, 1
    %p118 = por %p116, %p117
    %p119 = scmp.ne.s32.totalorder %s110, %s111
    %p120 = scmp.eq.s32.totalorder %s16, 0
    %p121 = por %p119, %p120
    %p122 = scmp.ne.s32.totalorder %s110, %s111
    %p123 = scmp.eq.s32.totalorder %s17, 1
    %p124 = por %p122, %p123
    %p126 = scmp.ne.s32.totalorder %s111, %s125
    %p127 = scmp.eq.s32.totalorder %s17, 0
    %p128 = por %p126, %p127
    %s129 = ssub.s32 %s11, %s18
    %p130 = scmp.eq.s32.totalorder %s129, 0
    %s132 = sadd.s32 %s131, 1
    %s133 = scalar_select %p130, %s131, %s132
    %p136 = pneg %p130
    %p137 = scmp.eq.s32.totalorder %s11, 1
    %p138 = por %p136, %p137
    %p139 = scmp.ne.s32.totalorder %s131, %s134
    %p140 = scmp.eq.s32.totalorder %s11, 0
    %p141 = por %p139, %p140
    %p142 = scmp.ne.s32.totalorder %s131, %s134
    %p143 = scmp.eq.s32.totalorder %s16, 1
    %p144 = por %p142, %p143
    %p145 = scmp.ne.s32.totalorder %s134, %s135
    %p146 = scmp.eq.s32.totalorder %s16, 0
    %p147 = por %p145, %p146
    %p148 = scmp.ne.s32.totalorder %s134, %s135
    %p149 = scmp.eq.s32.totalorder %s17, 1
    %p150 = por %p148, %p149
    %p152 = scmp.ne.s32.totalorder %s135, %s151
    %p153 = scmp.eq.s32.totalorder %s17, 0
    %p154 = por %p152, %p153
    %p155 = scmp.le.s32.totalorder 1, %s11
    %p156 = scmp.lt.s32.totalorder %s11, 3
    %p157 = pnand %p155, %p156
    %p158 = pneg %p157
    // Predicated region
    $region9: #{block_forward.1} parent=5 // pred_check
      _
    $region10: #{block_forward.1} parent=5 // pred_check_branch
      %160 = sbr.rel (%p157) target = $region12
    $region11: #{block_forward.1} parent=5 // pred_region
      %s161 = ssub.s32 %s11, 1
      // Predicated region
      $region13: #{block_forward.1} parent=11 // pred_check
        %p162 = pneg %p58
      $region14: #{block_forward.1} parent=11 // pred_check_branch
        %164 = sbr.rel (%p162) target = $region16
      $region15: #{block_forward.1} parent=11 // pred_region
        _
      $region16: #{block_forward.1} parent=11 // pred_fallthru
        _
      // Predicated region
      $region17: #{block_forward.1} parent=11 // pred_check
        %p165 = pneg %p79
      $region18: #{block_forward.1} parent=11 // pred_check_branch
        %167 = sbr.rel (%p165) target = $region20
      $region19: #{block_forward.1} parent=11 // pred_region
        _
      $region20: #{block_forward.1} parent=11 // pred_fallthru
        _
      // Predicated region
      $region21: #{block_forward.1} parent=11 // pred_check
        %p168 = pneg %p100
      $region22: #{block_forward.1} parent=11 // pred_check_branch
        %170 = sbr.rel (%p168) target = $region24
      $region23: #{block_forward.1} parent=11 // pred_region
        _
      $region24: #{block_forward.1} parent=11 // pred_fallthru
        _
      // Predicated region
      $region25: #{block_forward.1} parent=11 // pred_check
        %p171 = pneg %p121
      $region26: #{block_forward.1} parent=11 // pred_check_branch
        %173 = sbr.rel (%p171) target = $region28
      $region27: #{block_forward.1} parent=11 // pred_region
        _
      $region28: #{block_forward.1} parent=11 // pred_fallthru
        _
    $region12: #{block_forward.1} parent=5 // pred_fallthru
      _
    %p174 = scmp.lt.s32.totalorder %s11, 2
    // Predicated region
    $region29: #{block_forward.1} parent=5 // pred_check
      %p175 = pneg %p174
    $region30: #{block_forward.1} parent=5 // pred_check_branch
      %177 = sbr.rel (%p175) target = $region32
    $region31: #{block_forward.1} parent=5 // pred_region
      // Predicated region
      $region33: #{block_forward.1} parent=31 // pred_check
        %p178 = pneg %p31
      $region34: #{block_forward.1} parent=31 // pred_check_branch
        %180 = sbr.rel (%p178) target = $region36
      $region35: #{block_forward.1} parent=31 // pred_region
        %p181 = scmp.lt.s32.totalorder %s11, 1
        %s182 = scalar_select %p181, %s11, 1
        %s183 = smul.addr %s182, 3
        %s184 = smul.addr %s183, 2
        %s185 = scalar_lea.vmem %s0, %s184
      $region36: #{block_forward.1} parent=31 // pred_fallthru
        _
    $region32: #{block_forward.1} parent=5 // pred_fallthru
      _
    %p186 = scmp.le.s32.totalorder 1, %s11
    %p187 = scmp.lt.s32.totalorder %s11, 3
    %p188 = pnand %p186, %p187
    %p189 = pneg %p188
    // Predicated region
    $region37: #{block_forward.1} parent=5 // pred_check
      _
    $region38: #{block_forward.1} parent=5 // pred_check_branch
      %191 = sbr.rel (%p188) target = $region40
    $region39: #{block_forward.1} parent=5 // pred_region
      %s192 = ssub.s32 %s11, 1
      %p193 = scmp.lt.s32.totalorder %s16, 1
      %s194 = scalar_select %p193, %s16, 1
      %s195 = smul.addr %s194, 3
      %s196 = smul.addr %s195, 2
      %s197 = scalar_lea.vmem %s0, %s196
      %p198 = pneg %p37
      %p199 = pneg %p34
      %p200 = pneg %p58
      %p201 = pneg %p55
      %p202 = pneg %p79
      %p203 = pneg %p76
      %p204 = pneg %p100
      %p205 = pneg %p97
      %p206 = pneg %p121
      %p207 = pneg %p118
      %p208 = pneg %p147
      %p209 = pneg %p144
      %p210 = scmp.lt.s32.totalorder %s16, 1
      %s211 = scalar_select %p210, %s16, 1
      %s212 = smul.addr %s211, 2
      %s213 = smul.addr %s212, 8
      %s214 = scalar_lea.vmem %s5, %s213
      %p215 = scmp.lt.s32.totalorder %s16, 1
      %s216 = scalar_select %p215, %s16, 1
      %s217 = smul.addr %s216, 3
      %s218 = smul.addr %s217, 2
      %s219 = scalar_lea.vmem %s0, %s218
      %p220 = scmp.lt.s32.totalorder %s16, 1
      %s221 = scalar_select %p220, %s16, 1
      %s222 = smul.addr %s221, 2
      %s223 = smul.addr %s222, 8
      %s224 = scalar_lea.vmem %s5, %s223
      %v226 = vld [vmem:[%s3] sm:$0xff]
      %s227 = scalar_lea.vmem %s3, 8
      %v228 = vld [vmem:[%s227] sm:$0xff]
      %s229 = scalar_lea.vmem %s3, 16
      %v230 = vld [vmem:[%s229] sm:$0xff]
      %v231 = vld [vmem:[%s2] sm:$0xff]
      %v232 = vld [vmem:[%s4] sm:$0x3]
      %v233 = vld [vmem:[%s219] sm:$0xf]
      %v236 = vunpack.c.l.s4 1966171168
      %v237 = vunpack.c.0.s8 %v236
      %v238 = vlaneseq
      %v239 = vshrl.u32 %v238, 7
      %v240 = vsub.s32 %v237, %v239
      %v241 = vrot.slane %v232, %v240
      %v242 = vcombine.high %v241, %v241
      %v244 = vunpack.c.l.s4 1966171168
      %v245 = vunpack.c.0.s8 %v244
      %v246 = vlaneseq
      %v247 = vshrl.u32 %v246, 7
      %v248 = vsub.s32 %v245, %v247
      %v249 = vrot.slane %v241, %v248
      %v251 = vunpack.c.l.s4 1966171168
      %v252 = vunpack.c.0.s8 %v251
      %v253 = vlaneseq
      %v254 = vshrl.u32 %v253, 7
      %v255 = vsub.s32 %v252, %v254
      %v256 = vrot.slane %v242, %v255
      %v258 = vpack.i.b16 %v249, %v249
      %v260 = vlaneseq
      %v261 = vshrl.u32 %v260, 7
      %v262 = vsub.s32 0, %v261
      %v263 = vrot.slane %v258, %v262
      %v265 = vpack.i.b16 %v256, %v256
      %v267 = vlaneseq
      %v268 = vshrl.u32 %v267, 7
      %v269 = vsub.s32 0, %v268
      %v270 = vrot.slane %v265, %v269
      %v273 = vcombine.low %v263, %v270
      %v275 = vunpack.c.l.s4 1983009808
      %v276 = vunpack.c.0.s8 %v275
      %v277 = vlaneseq
      %v278 = vshrl.u32 %v277, 7
      %v279 = vsub.s32 %v276, %v278
      %v280 = vrot.slane %v273, %v279
      %v282 = vmul.bf16 %v233, %v280
      %v283 = vld [vmem:[%s1] sm:$0xf]
      %v284 = vld [vmem:[%s219] sm:$0x3f]
      %s285 = scalar_lea.vmem %s1, 4
      %v286 = vld [vmem:[%s285] sm:$0xf]
      %v288 = vcombine.high %v284, %v284
      %v290 = vunpack.c.l.s4 1983009808
      %v291 = vunpack.c.0.s8 %v290
      %v292 = vlaneseq
      %v293 = vshrl.u32 %v292, 7
      %v294 = vsub.s32 %v291, %v293
      %v295 = vrot.slane %v284, %v294
      %v297 = vunpack.c.l.s4 1983009808
      %v298 = vunpack.c.0.s8 %v297
      %v299 = vlaneseq
      %v300 = vshrl.u32 %v299, 7
      %v301 = vsub.s32 %v298, %v300
      %v302 = vrot.slane %v288, %v301
      %v303 = vcombine.high %v295, %v295
      %304 = vrot.lane.b32.xlu0 %v295, 127
      %v305 = vpop.permute.xlu0 %304
      %306 = vrot.lane.b32.xlu0 %v303, 127
      %v307 = vpop.permute.xlu0 %306
      %308 = vrot.lane.b32.xlu0 %v302, 127
      %v309 = vpop.permute.xlu0 %308
      %vm310 = vcmask 1039360
      %v311 = vsel %vm310, %v305, %v307
      %v312 = vsel %vm310, %v307, %v309
      %vm313 = vcmask 31744
      %v315 = vsel %vm313, %v286, 0
      %vm317 = vcmask 1041408
      %v319 = vsel %vm317, %v311, 0
      %v322 = vsel %vm317, %v312, 0
      %324 = vmatprep.subr.bf16.mxu0 %v322
      %325 = vmatpush1.bf16.msra.mxu0 %v319
      %326 = vmatprep.subr.bf16.mxu0 0
      %327 = vmatpush1.bf16.msra.mxu0 0
      %328 = vmatprep.subr.bf16.mxu0 0
      %329 = vmatpush1.bf16.msra.mxu0 0
      %330 = vmatprep.subr.bf16.mxu0 0
      %331 = vmatpush1.bf16.msra.mxu0 0
      %332 = vmatprep.subr.bf16.mxu0 0
      %333 = vmatpush1.bf16.msra.mxu0 0
      %334 = vmatprep.subr.bf16.mxu0 0
      %335 = vmatpush1.bf16.msra.mxu0 0
      %336 = vmatprep.subr.bf16.mxu0 0
      %337 = vmatpush1.bf16.msra.mxu0 0
      %338 = vmatprep.subr.bf16.mxu0 0
      %339 = vmatpush1.bf16.msra.mxu0 0
      %340 = vmatprep.subr.bf16.mxu0 0
      %341 = vmatpush1.bf16.msra.mxu0 0
      %342 = vmatprep.subr.bf16.mxu0 0
      %343 = vmatpush1.bf16.msra.mxu0 0
      %344 = vmatprep.subr.bf16.mxu0 0
      %345 = vmatpush1.bf16.msra.mxu0 0
      %346 = vmatprep.subr.bf16.mxu0 0
      %347 = vmatpush1.bf16.msra.mxu0 0
      %348 = vmatprep.subr.bf16.mxu0 0
      %349 = vmatpush1.bf16.msra.mxu0 0
      %350 = vmatprep.subr.bf16.mxu0 0
      %351 = vmatpush1.bf16.msra.mxu0 0
      %352 = vmatprep.subr.bf16.mxu0 0
      %353 = vmatpush1.bf16.msra.mxu0 0
      %354 = vmatprep.subr.bf16.mxu0 0
      %355 = vmatpush1.bf16.msra.mxu0 0
      %356 = vmatprep.mubr.bf16.mxu0 0
      %357 = vmatmul.mubr.bf16.gmra.mrb[0].mxu0 %v315
      %v358 = vpop.f32.mrb[0].mxu0
      %v359 = vadd.f32 0.0, %v358
      %v360 = vpop.f32.mrb[0].mxu0
      %v361 = vadd.f32 0.0, %v360
      %v362 = vpop.f32.mrb[0].mxu0
      %v363 = vpop.f32.mrb[0].mxu0
      %364 = vdwg.mxu0
      %v367 = vunpack.c.l.s4 1983009808
      %v368 = vunpack.c.0.s8 %v367
      %v369 = vlaneseq
      %v370 = vshrl.u32 %v369, 7
      %v371 = vsub.s32 %v368, %v370
      %v372 = vrot.slane %v282, %v371
      %v373 = vcombine.high %v372, %v372
      %v375 = vsel %vm313, %v283, 0
      %v378 = vsel %vm317, %v372, 0
      %v381 = vsel %vm317, %v373, 0
      %383 = vmatprep.subr.bf16.mxu0 %v381
      %384 = vmatpush1.bf16.msra.mxu0 %v378
      %385 = vmatprep.subr.bf16.mxu0 0
      %386 = vmatpush1.bf16.msra.mxu0 0
      %387 = vmatprep.subr.bf16.mxu0 0
      %388 = vmatpush1.bf16.msra.mxu0 0
      %389 = vmatprep.subr.bf16.mxu0 0
      %390 = vmatpush1.bf16.msra.mxu0 0
      %391 = vmatprep.subr.bf16.mxu0 0
      %392 = vmatpush1.bf16.msra.mxu0 0
      %393 = vmatprep.subr.bf16.mxu0 0
      %394 = vmatpush1.bf16.msra.mxu0 0
      %395 = vmatprep.subr.bf16.mxu0 0
      %396 = vmatpush1.bf16.msra.mxu0 0
      %397 = vmatprep.subr.bf16.mxu0 0
      %398 = vmatpush1.bf16.msra.mxu0 0
      %399 = vmatprep.subr.bf16.mxu0 0
      %400 = vmatpush1.bf16.msra.mxu0 0
      %401 = vmatprep.subr.bf16.mxu0 0
      %402 = vmatpush1.bf16.msra.mxu0 0
      %403 = vmatprep.subr.bf16.mxu0 0
      %404 = vmatpush1.bf16.msra.mxu0 0
      %405 = vmatprep.subr.bf16.mxu0 0
      %406 = vmatpush1.bf16.msra.mxu0 0
      %407 = vmatprep.subr.bf16.mxu0 0
      %408 = vmatpush1.bf16.msra.mxu0 0
      %409 = vmatprep.subr.bf16.mxu0 0
      %410 = vmatpush1.bf16.msra.mxu0 0
      %411 = vmatprep.subr.bf16.mxu0 0
      %412 = vmatpush1.bf16.msra.mxu0 0
      %413 = vmatprep.subr.bf16.mxu0 0
      %414 = vmatpush1.bf16.msra.mxu0 0
      %415 = vmatprep.mubr.bf16.mxu0 0
      %416 = vmatmul.mubr.bf16.gmra.mrb[0].mxu0 %v375
      %v417 = vpop.f32.mrb[0].mxu0
      %v418 = vadd.f32 %v359, %v417
      %v419 = vpop.f32.mrb[0].mxu0
      %v420 = vadd.f32 %v361, %v419
      %v421 = vpop.f32.mrb[0].mxu0
      %v422 = vpop.f32.mrb[0].mxu0
      %423 = vdwg.mxu0
      %v424 = vld [vmem:[%s219] sm:$0x3f]
      %v425 = vshrl.u32 %v249, 16
      %v426 = vpack.i.b16 %v425, %v425
      %v428 = vlaneseq
      %v429 = vshrl.u32 %v428, 7
      %v430 = vsub.s32 0, %v429
      %v431 = vrot.slane %v426, %v430
      %v432 = vshrl.u32 %v256, 16
      %v433 = vpack.i.b16 %v432, %v432
      %v435 = vlaneseq
      %v436 = vshrl.u32 %v435, 7
      %v437 = vsub.s32 0, %v436
      %v438 = vrot.slane %v433, %v437
      %v441 = vcombine.low %v431, %v438
      %v443 = vunpack.c.l.s4 1983009808
      %v444 = vunpack.c.0.s8 %v443
      %v445 = vlaneseq
      %v446 = vshrl.u32 %v445, 7
      %v447 = vsub.s32 %v444, %v446
      %v448 = vrot.slane %v441, %v447
      %449 = vrot.lane.b32.xlu0 %v448, 2
      %v450 = vpop.permute.xlu0 %449
      %v451 = vrot.slane %v450, 6
      %vm452 = vcmask 15360
      %v453 = vsel %vm452, %v451, %v450
      %v455 = vmul.bf16 %v424, %v453
      %s456 = scalar_lea.vmem %s1, 8
      %v457 = vld [vmem:[%s456] sm:$0xf]
      %v459 = vcombine.high %v455, %v455
      %v461 = vunpack.c.l.s4 1983009808
      %v462 = vunpack.c.0.s8 %v461
      %v463 = vlaneseq
      %v464 = vshrl.u32 %v463, 7
      %v465 = vsub.s32 %v462, %v464
      %v466 = vrot.slane %v455, %v465
      %v468 = vunpack.c.l.s4 1983009808
      %v469 = vunpack.c.0.s8 %v468
      %v470 = vlaneseq
      %v471 = vshrl.u32 %v470, 7
      %v472 = vsub.s32 %v469, %v471
      %v473 = vrot.slane %v459, %v472
      %v474 = vcombine.high %v466, %v466
      %475 = vrot.lane.b32.xlu0 %v466, 126
      %v476 = vpop.permute.xlu0 %475
      %477 = vrot.lane.b32.xlu0 %v474, 126
      %v478 = vpop.permute.xlu0 %477
      %479 = vrot.lane.b32.xlu0 %v473, 126
      %v480 = vpop.permute.xlu0 %479
      %vm481 = vcmask 1031168
      %v482 = vsel %vm481, %v476, %v478
      %v483 = vsel %vm481, %v478, %v480
      %v485 = vsel %vm313, %v457, 0
      %v488 = vsel %vm317, %v482, 0
      %v491 = vsel %vm317, %v483, 0
      %493 = vmatprep.subr.bf16.mxu0 %v491
      %494 = vmatpush1.bf16.msra.mxu0 %v488
      %495 = vmatprep.subr.bf16.mxu0 0
      %496 = vmatpush1.bf16.msra.mxu0 0
      %497 = vmatprep.subr.bf16.mxu0 0
      %498 = vmatpush1.bf16.msra.mxu0 0
      %499 = vmatprep.subr.bf16.mxu0 0
      %500 = vmatpush1.bf16.msra.mxu0 0
      %501 = vmatprep.subr.bf16.mxu0 0
      %502 = vmatpush1.bf16.msra.mxu0 0
      %503 = vmatprep.subr.bf16.mxu0 0
      %504 = vmatpush1.bf16.msra.mxu0 0
      %505 = vmatprep.subr.bf16.mxu0 0
      %506 = vmatpush1.bf16.msra.mxu0 0
      %507 = vmatprep.subr.bf16.mxu0 0
      %508 = vmatpush1.bf16.msra.mxu0 0
      %509 = vmatprep.subr.bf16.mxu0 0
      %510 = vmatpush1.bf16.msra.mxu0 0
      %511 = vmatprep.subr.bf16.mxu0 0
      %512 = vmatpush1.bf16.msra.mxu0 0
      %513 = vmatprep.subr.bf16.mxu0 0
      %514 = vmatpush1.bf16.msra.mxu0 0
      %515 = vmatprep.subr.bf16.mxu0 0
      %516 = vmatpush1.bf16.msra.mxu0 0
      %517 = vmatprep.subr.bf16.mxu0 0
      %518 = vmatpush1.bf16.msra.mxu0 0
      %519 = vmatprep.subr.bf16.mxu0 0
      %520 = vmatpush1.bf16.msra.mxu0 0
      %521 = vmatprep.subr.bf16.mxu0 0
      %522 = vmatpush1.bf16.msra.mxu0 0
      %523 = vmatprep.subr.bf16.mxu0 0
      %524 = vmatpush1.bf16.msra.mxu0 0
      %525 = vmatprep.mubr.bf16.mxu0 0
      %526 = vmatmul.mubr.bf16.gmra.mrb[0].mxu0 %v485
      %v527 = vpop.f32.mrb[0].mxu0
      %v528 = vadd.f32 0.0, %v527
      %v529 = vpop.f32.mrb[0].mxu0
      %v530 = vadd.f32 0.0, %v529
      %v531 = vpop.f32.mrb[0].mxu0
      %v532 = vpop.f32.mrb[0].mxu0
      %533 = vdwg.mxu0
      %v534 = vadd.f32 %v418, %v528
      %v535 = vadd.f32 %v420, %v530
      %v536 = vld [vmem:[%s219] sm:$0x3f]
      %537 = vrot.lane.b32.xlu0 %v280, 16
      %v538 = vpop.permute.xlu0 %537
      %v539 = vrot.slane %v538, 6
      %vm540 = vcmask 130048
      %v541 = vsel %vm540, %v539, %v538
      %v543 = vmul.bf16 %v536, %v541
      %s544 = scalar_lea.vmem %s1, 12
      %v545 = vld [vmem:[%s544] sm:$0xf]
      %v547 = vcombine.high %v543, %v543
      %v549 = vunpack.c.l.s4 1983009808
      %v550 = vunpack.c.0.s8 %v549
      %v551 = vlaneseq
      %v552 = vshrl.u32 %v551, 7
      %v553 = vsub.s32 %v550, %v552
      %v554 = vrot.slane %v543, %v553
      %v556 = vunpack.c.l.s4 1983009808
      %v557 = vunpack.c.0.s8 %v556
      %v558 = vlaneseq
      %v559 = vshrl.u32 %v558, 7
      %v560 = vsub.s32 %v557, %v559
      %v561 = vrot.slane %v547, %v560
      %v562 = vcombine.high %v554, %v554
      %563 = vrot.lane.b32.xlu0 %v554, 112
      %v564 = vpop.permute.xlu0 %563
      %565 = vrot.lane.b32.xlu0 %v562, 112
      %v566 = vpop.permute.xlu0 %565
      %567 = vrot.lane.b32.xlu0 %v561, 112
      %v568 = vpop.permute.xlu0 %567
      %vm569 = vcmask 916480
      %v570 = vsel %vm569, %v564, %v566
      %v571 = vsel %vm569, %v566, %v568
      %v573 = vsel %vm313, %v545, 0
      %v576 = vsel %vm317, %v570, 0
      %v579 = vsel %vm317, %v571, 0
      %581 = vmatprep.subr.bf16.mxu0 %v579
      %582 = vmatpush1.bf16.msra.mxu0 %v576
      %583 = vmatprep.subr.bf16.mxu0 0
      %584 = vmatpush1.bf16.msra.mxu0 0
      %585 = vmatprep.subr.bf16.mxu0 0
      %586 = vmatpush1.bf16.msra.mxu0 0
      %587 = vmatprep.subr.bf16.mxu0 0
      %588 = vmatpush1.bf16.msra.mxu0 0
      %589 = vmatprep.subr.bf16.mxu0 0
      %590 = vmatpush1.bf16.msra.mxu0 0
      %591 = vmatprep.subr.bf16.mxu0 0
      %592 = vmatpush1.bf16.msra.mxu0 0
      %593 = vmatprep.subr.bf16.mxu0 0
      %594 = vmatpush1.bf16.msra.mxu0 0
      %595 = vmatprep.subr.bf16.mxu0 0
      %596 = vmatpush1.bf16.msra.mxu0 0
      %597 = vmatprep.subr.bf16.mxu0 0
      %598 = vmatpush1.bf16.msra.mxu0 0
      %599 = vmatprep.subr.bf16.mxu0 0
      %600 = vmatpush1.bf16.msra.mxu0 0
      %601 = vmatprep.subr.bf16.mxu0 0
      %602 = vmatpush1.bf16.msra.mxu0 0
      %603 = vmatprep.subr.bf16.mxu0 0
      %604 = vmatpush1.bf16.msra.mxu0 0
      %605 = vmatprep.subr.bf16.mxu0 0
      %606 = vmatpush1.bf16.msra.mxu0 0
      %607 = vmatprep.subr.bf16.mxu0 0
      %608 = vmatpush1.bf16.msra.mxu0 0
      %609 = vmatprep.subr.bf16.mxu0 0
      %610 = vmatpush1.bf16.msra.mxu0 0
      %611 = vmatprep.subr.bf16.mxu0 0
      %612 = vmatpush1.bf16.msra.mxu0 0
      %613 = vmatprep.mubr.bf16.mxu0 0
      %614 = vmatmul.mubr.bf16.gmra.mrb[0].mxu0 %v573
      %v615 = vpop.f32.mrb[0].mxu0
      %v616 = vadd.f32 0.0, %v615
      %v617 = vpop.f32.mrb[0].mxu0
      %v618 = vadd.f32 0.0, %v617
      %v619 = vpop.f32.mrb[0].mxu0
      %v620 = vpop.f32.mrb[0].mxu0
      %621 = vdwg.mxu0
      %v622 = vadd.f32 %v534, %v616
      %v623 = vadd.f32 %v535, %v618
      %v624 = vld [vmem:[%s219] sm:$0x3f]
      %s625 = scalar_lea.vmem %s1, 16
      %v626 = vld [vmem:[%s625] sm:$0xf]
      %v628 = vcombine.high %v624, %v624
      %v630 = vunpack.c.l.s4 1983009808
      %v631 = vunpack.c.0.s8 %v630
      %v632 = vlaneseq
      %v633 = vshrl.u32 %v632, 7
      %v634 = vsub.s32 %v631, %v633
      %v635 = vrot.slane %v624, %v634
      %v637 = vunpack.c.l.s4 1983009808
      %v638 = vunpack.c.0.s8 %v637
      %v639 = vlaneseq
      %v640 = vshrl.u32 %v639, 7
      %v641 = vsub.s32 %v638, %v640
      %v642 = vrot.slane %v628, %v641
      %v643 = vcombine.high %v635, %v635
      %644 = vrot.lane.b32.xlu0 %v635, 111
      %v645 = vpop.permute.xlu0 %644
      %646 = vrot.lane.b32.xlu0 %v643, 111
      %v647 = vpop.permute.xlu0 %646
      %648 = vrot.lane.b32.xlu0 %v642, 111
      %v649 = vpop.permute.xlu0 %648
      %vm650 = vcmask 908288
      %v651 = vsel %vm650, %v645, %v647
      %v652 = vsel %vm650, %v647, %v649
      %v654 = vsel %vm313, %v626, 0
      %v657 = vsel %vm317, %v651, 0
      %v660 = vsel %vm317, %v652, 0
      %662 = vmatprep.subr.bf16.mxu0 %v660
      %663 = vmatpush1.bf16.msra.mxu0 %v657
      %664 = vmatprep.subr.bf16.mxu0 0
      %665 = vmatpush1.bf16.msra.mxu0 0
      %666 = vmatprep.subr.bf16.mxu0 0
      %667 = vmatpush1.bf16.msra.mxu0 0
      %668 = vmatprep.subr.bf16.mxu0 0
      %669 = vmatpush1.bf16.msra.mxu0 0
      %670 = vmatprep.subr.bf16.mxu0 0
      %671 = vmatpush1.bf16.msra.mxu0 0
      %672 = vmatprep.subr.bf16.mxu0 0
      %673 = vmatpush1.bf16.msra.mxu0 0
      %674 = vmatprep.subr.bf16.mxu0 0
      %675 = vmatpush1.bf16.msra.mxu0 0
      %676 = vmatprep.subr.bf16.mxu0 0
      %677 = vmatpush1.bf16.msra.mxu0 0
      %678 = vmatprep.subr.bf16.mxu0 0
      %679 = vmatpush1.bf16.msra.mxu0 0
      %680 = vmatprep.subr.bf16.mxu0 0
      %681 = vmatpush1.bf16.msra.mxu0 0
      %682 = vmatprep.subr.bf16.mxu0 0
      %683 = vmatpush1.bf16.msra.mxu0 0
      %684 = vmatprep.subr.bf16.mxu0 0
      %685 = vmatpush1.bf16.msra.mxu0 0
      %686 = vmatprep.subr.bf16.mxu0 0
      %687 = vmatpush1.bf16.msra.mxu0 0
      %688 = vmatprep.subr.bf16.mxu0 0
      %689 = vmatpush1.bf16.msra.mxu0 0
      %690 = vmatprep.subr.bf16.mxu0 0
      %691 = vmatpush1.bf16.msra.mxu0 0
      %692 = vmatprep.subr.bf16.mxu0 0
      %693 = vmatpush1.bf16.msra.mxu0 0
      %694 = vmatprep.mubr.bf16.mxu0 0
      %695 = vmatmul.mubr.bf16.gmra.mrb[0].mxu0 %v654
      %v696 = vpop.f32.mrb[0].mxu0
      %v697 = vadd.f32 0.0, %v696
      %v698 = vpop.f32.mrb[0].mxu0
      %v699 = vadd.f32 0.0, %v698
      %v700 = vpop.f32.mrb[0].mxu0
      %v701 = vpop.f32.mrb[0].mxu0
      %702 = vdwg.mxu0
      %v703 = vadd.f32 %v622, %v697
      %v704 = vadd.f32 %v623, %v699
      %v705 = vld [vmem:[%s219] sm:$0x3f]
      %706 = vrot.lane.b32.xlu0 %v448, 18
      %v707 = vpop.permute.xlu0 %706
      %v708 = vrot.slane %v707, 6
      %vm709 = vcmask 146432
      %v710 = vsel %vm709, %v708, %v707
      %v712 = vmul.bf16 %v705, %v710
      %s713 = scalar_lea.vmem %s1, 20
      %v714 = vld [vmem:[%s713] sm:$0xf]
      %v716 = vcombine.high %v712, %v712
      %v718 = vunpack.c.l.s4 1983009808
      %v719 = vunpack.c.0.s8 %v718
      %v720 = vlaneseq
      %v721 = vshrl.u32 %v720, 7
      %v722 = vsub.s32 %v719, %v721
      %v723 = vrot.slane %v712, %v722
      %v725 = vunpack.c.l.s4 1983009808
      %v726 = vunpack.c.0.s8 %v725
      %v727 = vlaneseq
      %v728 = vshrl.u32 %v727, 7
      %v729 = vsub.s32 %v726, %v728
      %v730 = vrot.slane %v716, %v729
      %v731 = vcombine.high %v723, %v723
      %732 = vrot.lane.b32.xlu0 %v723, 110
      %v733 = vpop.permute.xlu0 %732
      %734 = vrot.lane.b32.xlu0 %v731, 110
      %v735 = vpop.permute.xlu0 %734
      %736 = vrot.lane.b32.xlu0 %v730, 110
      %v737 = vpop.permute.xlu0 %736
      %vm738 = vcmask 900096
      %v739 = vsel %vm738, %v733, %v735
      %v740 = vsel %vm738, %v735, %v737
      %v742 = vsel %vm313, %v714, 0
      %v745 = vsel %vm317, %v739, 0
      %v748 = vsel %vm317, %v740, 0
      %750 = vmatprep.subr.bf16.mxu0 %v748
      %751 = vmatpush1.bf16.msra.mxu0 %v745
      %752 = vmatprep.subr.bf16.mxu0 0
      %753 = vmatpush1.bf16.msra.mxu0 0
      %754 = vmatprep.subr.bf16.mxu0 0
      %755 = vmatpush1.bf16.msra.mxu0 0
      %756 = vmatprep.subr.bf16.mxu0 0
      %757 = vmatpush1.bf16.msra.mxu0 0
      %758 = vmatprep.subr.bf16.mxu0 0
      %759 = vmatpush1.bf16.msra.mxu0 0
      %760 = vmatprep.subr.bf16.mxu0 0
      %761 = vmatpush1.bf16.msra.mxu0 0
      %762 = vmatprep.subr.bf16.mxu0 0
      %763 = vmatpush1.bf16.msra.mxu0 0
      %764 = vmatprep.subr.bf16.mxu0 0
      %765 = vmatpush1.bf16.msra.mxu0 0
      %766 = vmatprep.subr.bf16.mxu0 0
      %767 = vmatpush1.bf16.msra.mxu0 0
      %768 = vmatprep.subr.bf16.mxu0 0
      %769 = vmatpush1.bf16.msra.mxu0 0
      %770 = vmatprep.subr.bf16.mxu0 0
      %771 = vmatpush1.bf16.msra.mxu0 0
      %772 = vmatprep.subr.bf16.mxu0 0
      %773 = vmatpush1.bf16.msra.mxu0 0
      %774 = vmatprep.subr.bf16.mxu0 0
      %775 = vmatpush1.bf16.msra.mxu0 0
      %776 = vmatprep.subr.bf16.mxu0 0
      %777 = vmatpush1.bf16.msra.mxu0 0
      %778 = vmatprep.subr.bf16.mxu0 0
      %779 = vmatpush1.bf16.msra.mxu0 0
      %780 = vmatprep.subr.bf16.mxu0 0
      %781 = vmatpush1.bf16.msra.mxu0 0
      %782 = vmatprep.mubr.bf16.mxu0 0
      %783 = vmatmul.mubr.bf16.gmra.mrb[0].mxu0 %v742
      %v784 = vpop.f32.mrb[0].mxu0
      %v785 = vadd.f32 0.0, %v784
      %v786 = vpop.f32.mrb[0].mxu0
      %v787 = vadd.f32 0.0, %v786
      %v788 = vpop.f32.mrb[0].mxu0
      %v789 = vpop.f32.mrb[0].mxu0
      %790 = vdwg.mxu0
      %v791 = vadd.f32 %v703, %v785
      %v792 = vadd.f32 %v704, %v787
      %v793 = vld [vmem:[%s219] sm:$0x3f]
      %794 = vrot.lane.b32.xlu0 %v280, 32
      %v795 = vpop.permute.xlu0 %794
      %v796 = vrot.slane %v795, 6
      %vm797 = vcmask 261120
      %v798 = vsel %vm797, %v796, %v795
      %v800 = vmul.bf16 %v793, %v798
      %s801 = scalar_lea.vmem %s1, 24
      %v802 = vld [vmem:[%s801] sm:$0xf]
      %v804 = vcombine.high %v800, %v800
      %v806 = vunpack.c.l.s4 1983009808
      %v807 = vunpack.c.0.s8 %v806
      %v808 = vlaneseq
      %v809 = vshrl.u32 %v808, 7
      %v810 = vsub.s32 %v807, %v809
      %v811 = vrot.slane %v800, %v810
      %v813 = vunpack.c.l.s4 1983009808
      %v814 = vunpack.c.0.s8 %v813
      %v815 = vlaneseq
      %v816 = vshrl.u32 %v815, 7
      %v817 = vsub.s32 %v814, %v816
      %v818 = vrot.slane %v804, %v817
      %v819 = vcombine.high %v811, %v811
      %820 = vrot.lane.b32.xlu0 %v811, 96
      %v821 = vpop.permute.xlu0 %820
      %822 = vrot.lane.b32.xlu0 %v819, 96
      %v823 = vpop.permute.xlu0 %822
      %824 = vrot.lane.b32.xlu0 %v818, 96
      %v825 = vpop.permute.xlu0 %824
      %vm826 = vcmask 785408
      %v827 = vsel %vm826, %v821, %v823
      %v828 = vsel %vm826, %v823, %v825
      %v830 = vsel %vm313, %v802, 0
      %v833 = vsel %vm317, %v827, 0
      %v836 = vsel %vm317, %v828, 0
      %838 = vmatprep.subr.bf16.mxu0 %v836
      %839 = vmatpush1.bf16.msra.mxu0 %v833
      %840 = vmatprep.subr.bf16.mxu0 0
      %841 = vmatpush1.bf16.msra.mxu0 0
      %842 = vmatprep.subr.bf16.mxu0 0
      %843 = vmatpush1.bf16.msra.mxu0 0
      %844 = vmatprep.subr.bf16.mxu0 0
      %845 = vmatpush1.bf16.msra.mxu0 0
      %846 = vmatprep.subr.bf16.mxu0 0
      %847 = vmatpush1.bf16.msra.mxu0 0
      %848 = vmatprep.subr.bf16.mxu0 0
      %849 = vmatpush1.bf16.msra.mxu0 0
      %850 = vmatprep.subr.bf16.mxu0 0
      %851 = vmatpush1.bf16.msra.mxu0 0
      %852 = vmatprep.subr.bf16.mxu0 0
      %853 = vmatpush1.bf16.msra.mxu0 0
      %854 = vmatprep.subr.bf16.mxu0 0
      %855 = vmatpush1.bf16.msra.mxu0 0
      %856 = vmatprep.subr.bf16.mxu0 0
      %857 = vmatpush1.bf16.msra.mxu0 0
      %858 = vmatprep.subr.bf16.mxu0 0
      %859 = vmatpush1.bf16.msra.mxu0 0
      %860 = vmatprep.subr.bf16.mxu0 0
      %861 = vmatpush1.bf16.msra.mxu0 0
      %862 = vmatprep.subr.bf16.mxu0 0
      %863 = vmatpush1.bf16.msra.mxu0 0
      %864 = vmatprep.subr.bf16.mxu0 0
      %865 = vmatpush1.bf16.msra.mxu0 0
      %866 = vmatprep.subr.bf16.mxu0 0
      %867 = vmatpush1.bf16.msra.mxu0 0
      %868 = vmatprep.subr.bf16.mxu0 0
      %869 = vmatpush1.bf16.msra.mxu0 0
      %870 = vmatprep.mubr.bf16.mxu0 0
      %871 = vmatmul.mubr.bf16.gmra.mrb[0].mxu0 %v830
      %v872 = vpop.f32.mrb[0].mxu0
      %v873 = vadd.f32 0.0, %v872
      %v874 = vpop.f32.mrb[0].mxu0
      %v875 = vadd.f32 0.0, %v874
      %v876 = vpop.f32.mrb[0].mxu0
      %v877 = vpop.f32.mrb[0].mxu0
      %878 = vdwg.mxu0
      %v879 = vadd.f32 %v791, %v873
      %v880 = vadd.f32 %v792, %v875
      %v881 = vld [vmem:[%s219] sm:$0x3f]
      %s882 = scalar_lea.vmem %s1, 28
      %v883 = vld [vmem:[%s882] sm:$0xf]
      %v885 = vcombine.high %v881, %v881
      %v887 = vunpack.c.l.s4 1983009808
      %v888 = vunpack.c.0.s8 %v887
      %v889 = vlaneseq
      %v890 = vshrl.u32 %v889, 7
      %v891 = vsub.s32 %v888, %v890
      %v892 = vrot.slane %v881, %v891
      %v894 = vunpack.c.l.s4 1983009808
      %v895 = vunpack.c.0.s8 %v894
      %v896 = vlaneseq
      %v897 = vshrl.u32 %v896, 7
      %v898 = vsub.s32 %v895, %v897
      %v899 = vrot.slane %v885, %v898
      %v900 = vcombine.high %v892, %v892
      %901 = vrot.lane.b32.xlu0 %v892, 95
      %v902 = vpop.permute.xlu0 %901
      %903 = vrot.lane.b32.xlu0 %v900, 95
      %v904 = vpop.permute.xlu0 %903
      %905 = vrot.lane.b32.xlu0 %v899, 95
      %v906 = vpop.permute.xlu0 %905
      %vm907 = vcmask 777216
      %v908 = vsel %vm907, %v902, %v904
      %v909 = vsel %vm907, %v904, %v906
      %v911 = vsel %vm313, %v883, 0
      %v914 = vsel %vm317, %v908, 0
      %v917 = vsel %vm317, %v909, 0
      %919 = vmatprep.subr.bf16.mxu0 %v917
      %920 = vmatpush1.bf16.msra.mxu0 %v914
      %921 = vmatprep.subr.bf16.mxu0 0
      %922 = vmatpush1.bf16.msra.mxu0 0
      %923 = vmatprep.subr.bf16.mxu0 0
      %924 = vmatpush1.bf16.msra.mxu0 0
      %925 = vmatprep.subr.bf16.mxu0 0
      %926 = vmatpush1.bf16.msra.mxu0 0
      %927 = vmatprep.subr.bf16.mxu0 0
      %928 = vmatpush1.bf16.msra.mxu0 0
      %929 = vmatprep.subr.bf16.mxu0 0
      %930 = vmatpush1.bf16.msra.mxu0 0
      %931 = vmatprep.subr.bf16.mxu0 0
      %932 = vmatpush1.bf16.msra.mxu0 0
      %933 = vmatprep.subr.bf16.mxu0 0
      %934 = vmatpush1.bf16.msra.mxu0 0
      %935 = vmatprep.subr.bf16.mxu0 0
      %936 = vmatpush1.bf16.msra.mxu0 0
      %937 = vmatprep.subr.bf16.mxu0 0
      %938 = vmatpush1.bf16.msra.mxu0 0
      %939 = vmatprep.subr.bf16.mxu0 0
      %940 = vmatpush1.bf16.msra.mxu0 0
      %941 = vmatprep.subr.bf16.mxu0 0
      %942 = vmatpush1.bf16.msra.mxu0 0
      %943 = vmatprep.subr.bf16.mxu0 0
      %944 = vmatpush1.bf16.msra.mxu0 0
      %945 = vmatprep.subr.bf16.mxu0 0
      %946 = vmatpush1.bf16.msra.mxu0 0
      %947 = vmatprep.subr.bf16.mxu0 0
      %948 = vmatpush1.bf16.msra.mxu0 0
      %949 = vmatprep.subr.bf16.mxu0 0
      %950 = vmatpush1.bf16.msra.mxu0 0
      %951 = vmatprep.mubr.bf16.mxu0 0
      %952 = vmatmul.mubr.bf16.gmra.mrb[0].mxu0 %v911
      %v953 = vpop.f32.mrb[0].mxu0
      %v954 = vadd.f32 0.0, %v953
      %v955 = vpop.f32.mrb[0].mxu0
      %v956 = vadd.f32 0.0, %v955
      %v957 = vpop.f32.mrb[0].mxu0
      %v958 = vpop.f32.mrb[0].mxu0
      %959 = vdwg.mxu0
      %v960 = vadd.f32 %v879, %v954
      %v961 = vadd.f32 %v880, %v956
      %v962 = vld [vmem:[%s219] sm:$0x3f]
      %963 = vrot.lane.b32.xlu0 %v448, 34
      %v964 = vpop.permute.xlu0 %963
      %v965 = vrot.slane %v964, 6
      %vm966 = vcmask 277504
      %v967 = vsel %vm966, %v965, %v964
      %v969 = vmul.bf16 %v962, %v967
      %s970 = scalar_lea.vmem %s1, 32
      %v971 = vld [vmem:[%s970] sm:$0xf]
      %v973 = vcombine.high %v969, %v969
      %v975 = vunpack.c.l.s4 1983009808
      %v976 = vunpack.c.0.s8 %v975
      %v977 = vlaneseq
      %v978 = vshrl.u32 %v977, 7
      %v979 = vsub.s32 %v976, %v978
      %v980 = vrot.slane %v969, %v979
      %v982 = vunpack.c.l.s4 1983009808
      %v983 = vunpack.c.0.s8 %v982
      %v984 = vlaneseq
      %v985 = vshrl.u32 %v984, 7
      %v986 = vsub.s32 %v983, %v985
      %v987 = vrot.slane %v973, %v986
      %v988 = vcombine.high %v980, %v980
      %989 = vrot.lane.b32.xlu0 %v980, 94
      %v990 = vpop.permute.xlu0 %989
      %991 = vrot.lane.b32.xlu0 %v988, 94
      %v992 = vpop.permute.xlu0 %991
      %993 = vrot.lane.b32.xlu0 %v987, 94
      %v994 = vpop.permute.xlu0 %993
      %vm995 = vcmask 769024
      %v996 = vsel %vm995, %v990, %v992
      %v997 = vsel %vm995, %v992, %v994
      %v999 = vsel %vm313, %v971, 0
      %v1002 = vsel %vm317, %v996, 0
      %v1005 = vsel %vm317, %v997, 0
      %1007 = vmatprep.subr.bf16.mxu0 %v1005
      %1008 = vmatpush1.bf16.msra.mxu0 %v1002
      %1009 = vmatprep.subr.bf16.mxu0 0
      %1010 = vmatpush1.bf16.msra.mxu0 0
      %1011 = vmatprep.subr.bf16.mxu0 0
      %1012 = vmatpush1.bf16.msra.mxu0 0
      %1013 = vmatprep.subr.bf16.mxu0 0
      %1014 = vmatpush1.bf16.msra.mxu0 0
      %1015 = vmatprep.subr.bf16.mxu0 0
      %1016 = vmatpush1.bf16.msra.mxu0 0
      %1017 = vmatprep.subr.bf16.mxu0 0
      %1018 = vmatpush1.bf16.msra.mxu0 0
      %1019 = vmatprep.subr.bf16.mxu0 0
      %1020 = vmatpush1.bf16.msra.mxu0 0
      %1021 = vmatprep.subr.bf16.mxu0 0
      %1022 = vmatpush1.bf16.msra.mxu0 0
      %1023 = vmatprep.subr.bf16.mxu0 0
      %1024 = vmatpush1.bf16.msra.mxu0 0
      %1025 = vmatprep.subr.bf16.mxu0 0
      %1026 = vmatpush1.bf16.msra.mxu0 0
      %1027 = vmatprep.subr.bf16.mxu0 0
      %1028 = vmatpush1.bf16.msra.mxu0 0
      %1029 = vmatprep.subr.bf16.mxu0 0
      %1030 = vmatpush1.bf16.msra.mxu0 0
      %1031 = vmatprep.subr.bf16.mxu0 0
      %1032 = vmatpush1.bf16.msra.mxu0 0
      %1033 = vmatprep.subr.bf16.mxu0 0
      %1034 = vmatpush1.bf16.msra.mxu0 0
      %1035 = vmatprep.subr.bf16.mxu0 0
      %1036 = vmatpush1.bf16.msra.mxu0 0
      %1037 = vmatprep.subr.bf16.mxu0 0
      %1038 = vmatpush1.bf16.msra.mxu0 0
      %1039 = vmatprep.mubr.bf16.mxu0 0
      %1040 = vmatmul.mubr.bf16.gmra.mrb[0].mxu0 %v999
      %v1041 = vpop.f32.mrb[0].mxu0
      %v1042 = vadd.f32 0.0, %v1041
      %v1043 = vpop.f32.mrb[0].mxu0
      %v1044 = vadd.f32 0.0, %v1043
      %v1045 = vpop.f32.mrb[0].mxu0
      %v1046 = vpop.f32.mrb[0].mxu0
      %1047 = vdwg.mxu0
      %v1048 = vadd.f32 %v960, %v1042
      %v1049 = vadd.f32 %v961, %v1044
      %1051 = vset.pattern.permute.xlu0 0
      %1052 = vperm.xlu0 %1051, %v226
      %v1053 = vpop.permute.xlu0 %1052
      %v1055 = vadd.f32 %v1048, %v1053
      %v1056 = vadd.f32 %v1049, %v1053
      %v1057 = vadd.f32 %v1055, %v1056
      %1058 = vadd.xlane.f32.xlu0 %v1057
      %v1059 = vpop.xlane.xlu0 %1058
      %vm1060 = vcmask 64512
      %v1062 = vsel %vm1060, %v231, 0
      %1064 = vmatprep.subr.mxu0 0.0
      %1065 = vmatpush1.msra.mxu0 %v1059
      %1066 = vmatprep.subr.mxu0 0.0
      %1067 = vmatpush1.msra.mxu0 0.0
      %1068 = vmatprep.subr.mxu0 0.0
      %1069 = vmatpush1.msra.mxu0 0.0
      %1070 = vmatprep.subr.mxu0 0.0
      %1071 = vmatpush1.msra.mxu0 0.0
      %1072 = vmatprep.subr.mxu0 0.0
      %1073 = vmatpush1.msra.mxu0 0.0
      %1074 = vmatprep.subr.mxu0 0.0
      %1075 = vmatpush1.msra.mxu0 0.0
      %1076 = vmatprep.subr.mxu0 0.0
      %1077 = vmatpush1.msra.mxu0 0.0
      %1078 = vmatprep.subr.mxu0 0.0
      %1079 = vmatpush1.msra.mxu0 0.0
      %1080 = vmatprep.subr.mxu0 0.0
      %1081 = vmatpush1.msra.mxu0 0.0
      %1082 = vmatprep.subr.mxu0 0.0
      %1083 = vmatpush1.msra.mxu0 0.0
      %1084 = vmatprep.subr.mxu0 0.0
      %1085 = vmatpush1.msra.mxu0 0.0
      %1086 = vmatprep.subr.mxu0 0.0
      %1087 = vmatpush1.msra.mxu0 0.0
      %1088 = vmatprep.subr.mxu0 0.0
      %1089 = vmatpush1.msra.mxu0 0.0
      %1090 = vmatprep.subr.mxu0 0.0
      %1091 = vmatpush1.msra.mxu0 0.0
      %1092 = vmatprep.subr.mxu0 0.0
      %1093 = vmatpush1.msra.mxu0 0.0
      %1094 = vmatprep.subr.mxu0 0.0
      %1095 = vmatpush1.msra.mxu0 0.0
      %1096 = vmatprep.subr.mxu0 0.0
      %1097 = vmatpush1.msra.mxu0 0.0
      %1098 = vmatprep.subr.mxu0 0.0
      %1099 = vmatpush1.msra.mxu0 0.0
      %1100 = vmatprep.subr.mxu0 0.0
      %1101 = vmatpush1.msra.mxu0 0.0
      %1102 = vmatprep.subr.mxu0 0.0
      %1103 = vmatpush1.msra.mxu0 0.0
      %1104 = vmatprep.subr.mxu0 0.0
      %1105 = vmatpush1.msra.mxu0 0.0
      %1106 = vmatprep.subr.mxu0 0.0
      %1107 = vmatpush1.msra.mxu0 0.0
      %1108 = vmatprep.subr.mxu0 0.0
      %1109 = vmatpush1.msra.mxu0 0.0
      %1110 = vmatprep.subr.mxu0 0.0
      %1111 = vmatpush1.msra.mxu0 0.0
      %1112 = vmatprep.subr.mxu0 0.0
      %1113 = vmatpush1.msra.mxu0 0.0
      %1114 = vmatprep.subr.mxu0 0.0
      %1115 = vmatpush1.msra.mxu0 0.0
      %1116 = vmatprep.subr.mxu0 0.0
      %1117 = vmatpush1.msra.mxu0 0.0
      %1118 = vmatprep.subr.mxu0 0.0
      %1119 = vmatpush1.msra.mxu0 0.0
      %1120 = vmatprep.subr.mxu0 0.0
      %1121 = vmatpush1.msra.mxu0 0.0
      %1122 = vmatprep.subr.mxu0 0.0
      %1123 = vmatpush1.msra.mxu0 0.0
      %1124 = vmatprep.subr.mxu0 0.0
      %1125 = vmatpush1.msra.mxu0 0.0
      %1126 = vmatprep.subr.mxu0 0.0
      %1127 = vmatpush1.msra.mxu0 0.0
      %1128 = vmatprep.mubr.f32.mxu0 0.0
      %1129 = vmatmul.mubr.f32.gmra.mrb[0].mxu0 %v1062
      %v1130 = vpop.f32.mrb[0].mxu0
      %v1131 = vadd.f32 0.0, %v1130
      %v1132 = vpop.f32.mrb[0].mxu0
      %1133 = vdwg.mxu0
      %1135 = vset.pattern.permute.xlu0 0
      %1136 = vperm.xlu0 %1135, %v1131
      %v1137 = vpop.permute.xlu0 %1136
      %v1139 = vsub.f32 %v1055, %v1137
      %v1140 = vsub.f32 %v1056, %v1137
      %v1141 = vmul.f32 %v1139, %v1139
      %v1142 = vmul.f32 %v1140, %v1140
      %v1143 = vadd.f32 %v1141, %v1142
      %1144 = vadd.xlane.f32.xlu0 %v1143
      %v1145 = vpop.xlane.xlu0 %1144
      %1146 = vmatprep.subr.mxu0 0.0
      %1147 = vmatpush1.msra.mxu0 %v1145
      %1148 = vmatprep.subr.mxu0 0.0
      %1149 = vmatpush1.msra.mxu0 0.0
      %1150 = vmatprep.subr.mxu0 0.0
      %1151 = vmatpush1.msra.mxu0 0.0
      %1152 = vmatprep.subr.mxu0 0.0
      %1153 = vmatpush1.msra.mxu0 0.0
      %1154 = vmatprep.subr.mxu0 0.0
      %1155 = vmatpush1.msra.mxu0 0.0
      %1156 = vmatprep.subr.mxu0 0.0
      %1157 = vmatpush1.msra.mxu0 0.0
      %1158 = vmatprep.subr.mxu0 0.0
      %1159 = vmatpush1.msra.mxu0 0.0
      %1160 = vmatprep.subr.mxu0 0.0
      %1161 = vmatpush1.msra.mxu0 0.0
      %1162 = vmatprep.subr.mxu0 0.0
      %1163 = vmatpush1.msra.mxu0 0.0
      %1164 = vmatprep.subr.mxu0 0.0
      %1165 = vmatpush1.msra.mxu0 0.0
      %1166 = vmatprep.subr.mxu0 0.0
      %1167 = vmatpush1.msra.mxu0 0.0
      %1168 = vmatprep.subr.mxu0 0.0
      %1169 = vmatpush1.msra.mxu0 0.0
      %1170 = vmatprep.subr.mxu0 0.0
      %1171 = vmatpush1.msra.mxu0 0.0
      %1172 = vmatprep.subr.mxu0 0.0
      %1173 = vmatpush1.msra.mxu0 0.0
      %1174 = vmatprep.subr.mxu0 0.0
      %1175 = vmatpush1.msra.mxu0 0.0
      %1176 = vmatprep.subr.mxu0 0.0
      %1177 = vmatpush1.msra.mxu0 0.0
      %1178 = vmatprep.subr.mxu0 0.0
      %1179 = vmatpush1.msra.mxu0 0.0
      %1180 = vmatprep.subr.mxu0 0.0
      %1181 = vmatpush1.msra.mxu0 0.0
      %1182 = vmatprep.subr.mxu0 0.0
      %1183 = vmatpush1.msra.mxu0 0.0
      %1184 = vmatprep.subr.mxu0 0.0
      %1185 = vmatpush1.msra.mxu0 0.0
      %1186 = vmatprep.subr.mxu0 0.0
      %1187 = vmatpush1.msra.mxu0 0.0
      %1188 = vmatprep.subr.mxu0 0.0
      %1189 = vmatpush1.msra.mxu0 0.0
      %1190 = vmatprep.subr.mxu0 0.0
      %1191 = vmatpush1.msra.mxu0 0.0
      %1192 = vmatprep.subr.mxu0 0.0
      %1193 = vmatpush1.msra.mxu0 0.0
      %1194 = vmatprep.subr.mxu0 0.0
      %1195 = vmatpush1.msra.mxu0 0.0
      %1196 = vmatprep.subr.mxu0 0.0
      %1197 = vmatpush1.msra.mxu0 0.0
      %1198 = vmatprep.subr.mxu0 0.0
      %1199 = vmatpush1.msra.mxu0 0.0
      %1200 = vmatprep.subr.mxu0 0.0
      %1201 = vmatpush1.msra.mxu0 0.0
      %1202 = vmatprep.subr.mxu0 0.0
      %1203 = vmatpush1.msra.mxu0 0.0
      %1204 = vmatprep.subr.mxu0 0.0
      %1205 = vmatpush1.msra.mxu0 0.0
      %1206 = vmatprep.subr.mxu0 0.0
      %1207 = vmatpush1.msra.mxu0 0.0
      %1208 = vmatprep.subr.mxu0 0.0
      %1209 = vmatpush1.msra.mxu0 0.0
      %1210 = vmatprep.mubr.f32.mxu0 0.0
      %1211 = vmatmul.mubr.f32.gmra.mrb[0].mxu0 %v1062
      %v1212 = vpop.f32.mrb[0].mxu0
      %v1213 = vadd.f32 1e-05, %v1212
      %v1214 = vpop.f32.mrb[0].mxu0
      %1215 = vdwg.mxu0
      %v1216 = vrsqrt.pop %v1213
      %v1217 = vmul.f32 %v228, %v1216
      %1219 = vset.pattern.permute.xlu0 0
      %1220 = vperm.xlu0 %1219, %v1217
      %v1221 = vpop.permute.xlu0 %1220
      %v1223 = vmul.f32 %v1139, %v1221
      %v1224 = vmul.f32 %v1140, %v1221
      %1226 = vset.pattern.permute.xlu0 0
      %1227 = vperm.xlu0 %1226, %v230
      %v1228 = vpop.permute.xlu0 %1227
      %v1230 = vadd.f32 %v1223, %v1228
      %v1231 = vadd.f32 %v1224, %v1228
      %v1232 = vxor.u32 %v1230, 2147483648
      %v1233 = vxor.u32 %v1231, 2147483648
      %v1234 = vmul.f32 %v1232, 1.442695
      %v1235 = vpow.pop %v1234
      %v1236 = vmul.f32 %v1233, 1.442695
      %v1237 = vpow.pop %v1236
      %v1238 = vadd.f32 %v1235, 1.0
      %v1239 = vadd.f32 %v1237, 1.0
      %v1240 = vrcp.pop %v1238
      %v1241 = vmul.f32 1.0, %v1240
      %v1242 = vrcp.pop %v1239
      %v1243 = vmul.f32 1.0, %v1242
      %v1244 = vmul.f32 %v1230, %v1241
      %v1245 = vmul.f32 %v1231, %v1243
      %1246 = vst [vmem:[%s224] sm:$0xff] %v1244
      %1247 = vst [vmem:[%s224 + $0x8] sm:$0xff] %v1245
      %p1248 = scmp.lt.s32.totalorder %s16, 1
      %s1249 = scalar_select %p1248, %s16, 1
      %s1250 = smul.addr %s1249, 2
      %s1251 = smul.addr %s1250, 8
      %s1252 = scalar_lea.vmem %s5, %s1251
      // Predicated region
      $region41: #{block_forward.1} parent=39 // pred_check
        %p1253 = pneg %p144
      $region42: #{block_forward.1} parent=39 // pred_check_branch
        %1255 = sbr.rel (%p1253) target = $region44
      $region43: #{block_forward.1} parent=39 // pred_region
        _
      $region44: #{block_forward.1} parent=39 // pred_fallthru
        _
    $region40: #{block_forward.1} parent=5 // pred_fallthru
      _
    %p1256 = scmp.le.s32.totalorder 2, %s11
    // Predicated region
    $region45: #{block_forward.1} parent=5 // pred_check
      %p1257 = pneg %p1256
    $region46: #{block_forward.1} parent=5 // pred_check_branch
      %1259 = sbr.rel (%p1257) target = $region48
    $region47: #{block_forward.1} parent=5 // pred_region
      %s1260 = ssub.s32 %s11, 2
      // Predicated region
      $region49: #{block_forward.1} parent=47 // pred_check
        %p1261 = pneg %p150
      $region50: #{block_forward.1} parent=47 // pred_check_branch
        %1263 = sbr.rel (%p1261) target = $region52
      $region51: #{block_forward.1} parent=47 // pred_region
        %p1264 = scmp.lt.s32.totalorder %s17, 1
        %s1265 = scalar_select %p1264, %s17, 1
        %s1266 = smul.addr %s1265, 2
        %s1267 = smul.addr %s1266, 8
        %s1268 = scalar_lea.vmem %s5, %s1267
      $region52: #{block_forward.1} parent=47 // pred_fallthru
        _
    $region48: #{block_forward.1} parent=5 // pred_fallthru
      _
  $region6: #{block_forward.1} parent=0 // loop_footer
    %s15 = sadd.s32 1, %s11
  $region7: #{block_forward.1} parent=0 // loop_footer_branch
    %10 = sbr.rel target = $region3
  $region8: #{block_forward.1} parent=0 // loop_exit
    _

</llo_original>
